<compile_context>
chip_gen: v5e
topology: v5e:2x2
jax: 0.10.0
libtpu: 0.0.40
codegen_flags: <defaults>
</compile_context>

<pallas_src>
import functools

import jax
import jax.numpy as jnp
from jax.experimental import pallas as pl
from jax.experimental.pallas import tpu as pltpu


def _resblock_kernel(x_ref, wc_ref, bc_ref, w2_ref, o_ref, *, hid):
    """One row tile of: out = relu(x@W1 + b1) @ W2 + (x@Ws + bs + b2)."""
    x = x_ref[...]                                              # (tm, in_dim)
    # Fused first-stage matmul: x @ [W1 | Ws] -> (tm, hid + out_dim), f32 acc.
    y = jnp.dot(x, wc_ref[...], preferred_element_type=jnp.float32)
    y = y + bc_ref[...]                                         # bc = [b1 | b2 + bs]
    h = jnp.maximum(y[:, :hid], 0.0)                            # hidden activation
    sc = y[:, hid:]                                             # shortcut (+ folded biases)
    out = jnp.dot(h.astype(w2_ref.dtype), w2_ref[...],
                  preferred_element_type=jnp.float32) + sc
    o_ref[...] = out.astype(o_ref.dtype)


def _round_up(v, m):
    return (v + m - 1) // m * m


def resblock_forward(x, params, *, tm=256, compute_dtype=None,
                     vmem_limit_bytes=None):
    """x: (B, N, in_dim). params: dict of pre-transposed weights (fan_in, fan_out)."""
    B, N, in_dim = x.shape
    w1, b1 = params["w1"], params["b1"]          # (in_dim, hid), (1, hid)
    w2, b2 = params["w2"], params["b2"]          # (hid, out),   (1, out)
    ws, bs = params["ws"], params["bs"]          # (in_dim, out),(1, out)
    hid = w1.shape[1]
    out_dim = w2.shape[1]
    cdt = compute_dtype if compute_dtype is not None else x.dtype

    # Fold weights / biases once on the wrapper side.
    wc = jnp.concatenate([w1, ws], axis=1).astype(cdt)                # (in_dim, hid+out)
    bc = jnp.concatenate([b1, b2 + bs], axis=1).astype(jnp.float32)   # (1, hid+out)
    w2c = w2.astype(cdt)

    M = B * N
    x2d = x.reshape(M, in_dim).astype(cdt)

    # Row tile: large for MXU / DMA efficiency, shrunk + zero-padded so any M works.
    tm = max(8, _round_up(tm, 8))
    tm = min(tm, _round_up(M, 8))
    Mp = _round_up(M, tm)
    if Mp != M:
        x2d = jnp.pad(x2d, ((0, Mp - M), (0, 0)))

    const = lambda i: (0, 0)   # weights/biases: same block every step (stay resident)

    out2d = pl.pallas_call(
        functools.partial(_resblock_kernel, hid=hid),
        out_shape=jax.ShapeDtypeStruct((Mp, out_dim), x.dtype),
        grid_spec=pl.GridSpec(
            grid=(Mp // tm,),
            in_specs=[
                pl.BlockSpec((tm, in_dim), lambda i: (i, 0)),     # x row tile
                pl.BlockSpec((in_dim, hid + out_dim), const),     # [W1 | Ws]
                pl.BlockSpec((1, hid + out_dim), const),          # [b1 | b2+bs]
                pl.BlockSpec((hid, out_dim), const),              # W2
            ],
            out_specs=pl.BlockSpec((tm, out_dim), lambda i: (i, 0)),
        ),
        compiler_params=pltpu.CompilerParams(
            dimension_semantics=("parallel",),
            vmem_limit_bytes=vmem_limit_bytes),
    )(x2d, wc, bc, w2c)

    return out2d[:M].reshape(B, N, out_dim)


def make_params(key, in_dim, hidden_dim, out_dim):
    """Deterministic PyTorch-like init. Weights stored pre-transposed (fan_in, fan_out)."""
    def linear(k, fan_in, fan_out):
        kw, kb = jax.random.split(k)
        bound = 1.0 / (fan_in ** 0.5)
        w = jax.random.uniform(kw, (fan_in, fan_out), jnp.float32, -bound, bound)
        b = jax.random.uniform(kb, (1, fan_out), jnp.float32, -bound, bound)
        return w, b

    k1, k2, k3 = jax.random.split(key, 3)
    w1, b1 = linear(k1, in_dim, hidden_dim)
    w2, b2 = linear(k2, hidden_dim, out_dim)
    ws, bs = linear(k3, in_dim, out_dim)
    return {"w1": w1, "b1": b1, "w2": w2, "b2": b2, "ws": ws, "bs": bs}


def resblock_ref(x, p):
    """Pure-JAX reference matching the PyTorch forward (if_bn=False)."""
    h = jnp.maximum(x @ p["w1"] + p["b1"][0], 0.0)
    return h @ p["w2"] + p["b2"][0] + (x @ p["ws"] + p["bs"][0])


if __name__ == "__main__":
    # Module defaults are 128-dim channels; keep the point count small.
    B, N = 2, 64
    in_dim, hidden_dim, out_dim = 128, 128, 128

    key = jax.random.PRNGKey(0)
    kx, kp = jax.random.split(key)
    x = jax.random.normal(kx, (B, N, in_dim), jnp.float32)
    params = make_params(kp, in_dim, hidden_dim, out_dim)

    ref = resblock_ref(x, params)

    # f32 path.
    out = jax.block_until_ready(resblock_forward(x, params, tm=256))
    assert out.shape == (B, N, out_dim)
    assert jnp.allclose(out, ref, atol=1e-4, rtol=1e-4), "f32 mismatch vs reference"

    # bf16-operand / f32-accumulation path (full-rate MXU, half the HBM traffic).
    out_bf16 = jax.block_until_ready(
        resblock_forward(x, params, tm=256, compute_dtype=jnp.bfloat16))
    assert jnp.allclose(out_bf16, ref, atol=5e-2, rtol=5e-2), "bf16 mismatch vs reference"

    # Ragged row count coverage: M = 2*50 is not a multiple of the row tile.
    x_ragged = jax.random.normal(kx, (2, 50, in_dim), jnp.float32)
    out_r = jax.block_until_ready(resblock_forward(x_ragged, params, tm=256))
    assert jnp.allclose(out_r, resblock_ref(x_ragged, params),
                        atol=1e-4, rtol=1e-4), "ragged-M mismatch vs reference"

    # NOTE: the if_bn branch is off in the default config.
    # TODO(synk): BatchNorm1d (training-mode batch stats) not implemented in-kernel.
    print("KERNEL_OK")
</pallas_src>

<mosaic_0001>
module attributes {stable_mosaic.version = 11 : i64} {
  func.func @_resblock_kernel(%arg0: i32, %arg1: memref<128x128xf32, #tpu.memory_space<vmem>>, %arg2: memref<128x256xf32, #tpu.memory_space<vmem>>, %arg3: memref<1x256xf32, #tpu.memory_space<vmem>>, %arg4: memref<128x128xf32, #tpu.memory_space<vmem>>, %arg5: memref<128x128xf32, #tpu.memory_space<vmem>>) attributes {dimension_semantics = [#tpu.dimension_semantics<parallel>], iteration_bounds = array<i64: 1>, scalar_prefetch = 0 : i64, scratch_operands = 0 : i64, tpu.core_type = #tpu.core_type<tc>, window_params = [{transform_indices = @transform_0, window_bounds = array<i64: 128, 128>}, {pipeline_mode = #tpu.pipeline_mode<synchronous>, transform_indices = @transform_1, window_bounds = array<i64: 128, 256>}, {pipeline_mode = #tpu.pipeline_mode<synchronous>, transform_indices = @transform_2, window_bounds = array<i64: 1, 256>}, {pipeline_mode = #tpu.pipeline_mode<synchronous>, transform_indices = @transform_3, window_bounds = array<i64: 128, 128>}, {transform_indices = @transform_4, window_bounds = array<i64: 128, 128>}]} {
    %c0 = arith.constant 0 : index
    %c0_0 = arith.constant 0 : index
    %0 = vector.load %arg1[%c0, %c0_0] : memref<128x128xf32, #tpu.memory_space<vmem>>, vector<128x128xf32>
    %c0_1 = arith.constant 0 : index
    %c0_2 = arith.constant 0 : index
    %1 = vector.load %arg2[%c0_1, %c0_2] : memref<128x256xf32, #tpu.memory_space<vmem>>, vector<128x256xf32>
    %cst = arith.constant dense<0.000000e+00> : vector<128x256xf32>
    %2 = tpu.matmul %0, %1, %cst {dimension_numbers = #tpu.dot_dimension_numbers<[1], [0], [0], [1], [0, 0, 1, 1], [], []>} : vector<128x128xf32>, vector<128x256xf32>, vector<128x256xf32> -> vector<128x256xf32>
    %c0_3 = arith.constant 0 : index
    %c0_4 = arith.constant 0 : index
    %3 = vector.load %arg3[%c0_3, %c0_4] : memref<1x256xf32, #tpu.memory_space<vmem>>, vector<1x256xf32>
    %4 = vector.broadcast %3 : vector<1x256xf32> to vector<128x256xf32>
    %5 = arith.addf %2, %4 : vector<128x256xf32>
    %6 = vector.extract_strided_slice %5 {offsets = [0, 0], sizes = [128, 128], strides = [1, 1]} : vector<128x256xf32> to vector<128x128xf32>
    %cst_5 = arith.constant 0.000000e+00 : f32
    %7 = vector.broadcast %cst_5 : f32 to vector<128x128xf32>
    %8 = arith.maximumf %6, %7 : vector<128x128xf32>
    %9 = vector.extract_strided_slice %5 {offsets = [0, 128], sizes = [128, 128], strides = [1, 1]} : vector<128x256xf32> to vector<128x128xf32>
    %c0_6 = arith.constant 0 : index
    %c0_7 = arith.constant 0 : index
    %10 = vector.load %arg4[%c0_6, %c0_7] : memref<128x128xf32, #tpu.memory_space<vmem>>, vector<128x128xf32>
    %cst_8 = arith.constant dense<0.000000e+00> : vector<128x128xf32>
    %11 = tpu.matmul %8, %10, %cst_8 {dimension_numbers = #tpu.dot_dimension_numbers<[1], [0], [0], [1], [0, 0, 1, 1], [], []>} : vector<128x128xf32>, vector<128x128xf32>, vector<128x128xf32> -> vector<128x128xf32>
    %12 = arith.addf %11, %9 : vector<128x128xf32>
    %c0_9 = arith.constant 0 : index
    %c0_10 = arith.constant 0 : index
    %13 = vector.load %arg5[%c0_9, %c0_10] : memref<128x128xf32, #tpu.memory_space<vmem>>, vector<128x128xf32>
    tpu.vector_store %arg5[%c0_9, %c0_10], %12 {strides = array<i32>} : memref<128x128xf32, #tpu.memory_space<vmem>>, vector<128x128xf32>,
    return
  }
  func.func @transform_0(%arg0: i32) -> (i32, i32) {
    %c0_i32 = arith.constant 0 : i32
    %c0_i32_0 = arith.constant 0 : i32
    return %arg0, %c0_i32 : i32, i32
  }
  func.func @transform_1(%arg0: i32) -> (i32, i32) {
    %c0_i32 = arith.constant 0 : i32
    %c0_i32_0 = arith.constant 0 : i32
    %c0_i32_1 = arith.constant 0 : i32
    return %c0_i32, %c0_i32_0 : i32, i32
  }
  func.func @transform_2(%arg0: i32) -> (i32, i32) {
    %c0_i32 = arith.constant 0 : i32
    %c0_i32_0 = arith.constant 0 : i32
    %c0_i32_1 = arith.constant 0 : i32
    return %c0_i32, %c0_i32_0 : i32, i32
  }
  func.func @transform_3(%arg0: i32) -> (i32, i32) {
    %c0_i32 = arith.constant 0 : i32
    %c0_i32_0 = arith.constant 0 : i32
    %c0_i32_1 = arith.constant 0 : i32
    return %c0_i32, %c0_i32_0 : i32, i32
  }
  func.func @transform_4(%arg0: i32) -> (i32, i32) {
    %c0_i32 = arith.constant 0 : i32
    %c0_i32_0 = arith.constant 0 : i32
    return %arg0, %c0_i32 : i32, i32
  }
}

</mosaic_0001>

<llo_original>
// kernel: tpu_custom_call.1
$region0: #{tpu_custom_call.1}
  #allocation0 [shape = 'u32[]', space=smem, size = 0x4, offset = 0x4, fixed_abs, tag = 'smem constant byte address 0x4 - core index']
  #allocation1 [shape = 'u32[72,128]{1,0:T(1,128)}', space=vmem, size = 0x9000, scoped, tag = 'internal scratch']
  %s0 = inlined_call_operand.hbm [shape: f32[128,128], index: 0, kind: input, shape index: {}]
  %s1 = inlined_call_operand.hbm [shape: f32[128,256], index: 1, kind: input, shape index: {}]
  %s2 = inlined_call_operand.hbm [shape: f32[1,256], index: 2, kind: input, shape index: {}]
  %s3 = inlined_call_operand.hbm [shape: f32[128,128], index: 3, kind: input, shape index: {}]
  %s4 = inlined_call_operand.hbm [shape: f32[128,128], index: 4, kind: output, shape index: {}]
  %s5 = sld [smem:[#allocation0]]
  $region42: #{tpu_custom_call.1} parent=0
    _
  %s7 = ssub.s32 1, %s5
  %s8 = scalar_select 0, %s7, %s5
  $region1: #{tpu_custom_call.1} parent=0
    #allocation2 [shape = 'u8[65536]{0}', space=vmem, size = 0x10000, scoped, tag = 'input window, operand 0, single buffered']
    #allocation3 [shape = 's32[1]{0}', space=sflag, size = 0x4, scoped, tag = 'scoped memory for tpu_custom_call.1']
    #allocation4 [shape = 's32[1]{0}', space=sflag, size = 0x4, scoped, tag = 'scoped memory for tpu_custom_call.1']
    #allocation5 [shape = 'u8[131072]{0}', space=vmem, size = 0x20000, scoped, tag = 'input window, operand 1, single buffered']
    #allocation6 [shape = 's32[1]{0}', space=sflag, size = 0x4, scoped, tag = 'scoped memory for tpu_custom_call.1']
    #allocation7 [shape = 'u8[1024]{0}', space=vmem, size = 0x400, scoped, tag = 'input window, operand 2, single buffered']
    #allocation8 [shape = 'u8[65536]{0}', space=vmem, size = 0x10000, scoped, tag = 'input window, operand 3, single buffered']
    #allocation9 [shape = 's32[1]{0}', space=sflag, size = 0x4, scoped, tag = 'scoped memory for tpu_custom_call.1']
    #allocation10 [shape = 'u8[65536]{0}', space=vmem, size = 0x10000, scoped, tag = 'output window, operand 0, single buffered']
    %9 = vsyncpa [#allocation3], 0
    %10 = vsyncpa [#allocation6], 0
    %11 = vsyncpa [#allocation9], 0
    %12 = vsyncpa [#allocation4], 0
    // Predicated region
    $region2: #{tpu_custom_call.1} parent=1 // pred_check
      _
    $region3: #{tpu_custom_call.1} parent=1 // pred_check_branch
      %14 = sbr.rel (0) target = $region5
    $region4: #{tpu_custom_call.1} parent=1 // pred_region
      %16 = vsyncadd [#allocation3], 0
      %s17 = sshll.u32 %s0, 4
      %s18 = int_to_ptr.hbm [resolvable:$true] %s17
      %s19 = sshll.u32 [#allocation2], 4
      %s20 = int_to_ptr.vmem [resolvable:$true] %s19
      %25 = dma.hbm_to_vmem [thread:$0]  %s18, 2048, %s20, [#allocation3], 128, 128, 8
    $region5: #{tpu_custom_call.1} parent=1 // pred_fallthru
      _
    // Predicated region
    $region6: #{tpu_custom_call.1} parent=1 // pred_check
      _
    $region7: #{tpu_custom_call.1} parent=1 // pred_check_branch
      %27 = sbr.rel (0) target = $region9
    $region8: #{tpu_custom_call.1} parent=1 // pred_region
      %29 = vsyncadd [#allocation6], 0
      %s30 = sshll.u32 %s1, 4
      %s31 = int_to_ptr.hbm [resolvable:$true] %s30
      %s32 = sshll.u32 [#allocation5], 4
      %s33 = int_to_ptr.vmem [resolvable:$true] %s32
      %38 = dma.hbm_to_vmem [thread:$0]  %s31, 4096, %s33, [#allocation6], 256, 256, 16
    $region9: #{tpu_custom_call.1} parent=1 // pred_fallthru
      _
    // Predicated region
    $region10: #{tpu_custom_call.1} parent=1 // pred_check
      _
    $region11: #{tpu_custom_call.1} parent=1 // pred_check_branch
      %40 = sbr.rel (0) target = $region13
    $region12: #{tpu_custom_call.1} parent=1 // pred_region
      %42 = vsyncadd [#allocation6], 0
      %s44 = sshll.u32 %s2, 4
      %s45 = int_to_ptr.hbm [resolvable:$true] %s44
      %s46 = sshll.u32 [#allocation7], 4
      %s47 = int_to_ptr.vmem [resolvable:$true] %s46
      %49 = dma.hbm_to_vmem [thread:$0]  %s45, 32, %s47, [#allocation6]
    $region13: #{tpu_custom_call.1} parent=1 // pred_fallthru
      _
    // Predicated region
    $region14: #{tpu_custom_call.1} parent=1 // pred_check
      _
    $region15: #{tpu_custom_call.1} parent=1 // pred_check_branch
      %51 = sbr.rel (0) target = $region17
    $region16: #{tpu_custom_call.1} parent=1 // pred_region
      %53 = vsyncadd [#allocation9], 0
      %s54 = sshll.u32 %s3, 4
      %s55 = int_to_ptr.hbm [resolvable:$true] %s54
      %s56 = sshll.u32 [#allocation8], 4
      %s57 = int_to_ptr.vmem [resolvable:$true] %s56
      %62 = dma.hbm_to_vmem [thread:$0]  %s55, 2048, %s57, [#allocation9], 128, 128, 8
    $region17: #{tpu_custom_call.1} parent=1 // pred_fallthru
      _
    // Predicated region
    $region18: #{tpu_custom_call.1} parent=1 // pred_check
      _
    $region19: #{tpu_custom_call.1} parent=1 // pred_check_branch
      %64 = sbr.rel (0) target = $region21
    $region20: #{tpu_custom_call.1} parent=1 // pred_region
      %66 = dma.done [#allocation3], 2048
    $region21: #{tpu_custom_call.1} parent=1 // pred_fallthru
      _
    // Predicated region
    $region22: #{tpu_custom_call.1} parent=1 // pred_check
      _
    $region23: #{tpu_custom_call.1} parent=1 // pred_check_branch
      %68 = sbr.rel (0) target = $region25
    $region24: #{tpu_custom_call.1} parent=1 // pred_region
      %70 = dma.done [#allocation6], 4096
    $region25: #{tpu_custom_call.1} parent=1 // pred_fallthru
      _
    // Predicated region
    $region26: #{tpu_custom_call.1} parent=1 // pred_check
      _
    $region27: #{tpu_custom_call.1} parent=1 // pred_check_branch
      %72 = sbr.rel (0) target = $region29
    $region28: #{tpu_custom_call.1} parent=1 // pred_region
      %74 = dma.done [#allocation6], 32
    $region29: #{tpu_custom_call.1} parent=1 // pred_fallthru
      _
    // Predicated region
    $region30: #{tpu_custom_call.1} parent=1 // pred_check
      _
    $region31: #{tpu_custom_call.1} parent=1 // pred_check_branch
      %76 = sbr.rel (0) target = $region33
    $region32: #{tpu_custom_call.1} parent=1 // pred_region
      %78 = dma.done [#allocation9], 2048
    $region33: #{tpu_custom_call.1} parent=1 // pred_fallthru
      _
    %v79 = vld [vmem:[#allocation2] sm:$0xff]
    %v80 = vld [vmem:[#allocation2 + $0x8] sm:$0xff]
    %v81 = vld [vmem:[#allocation2 + $0x10] sm:$0xff]
    %v82 = vld [vmem:[#allocation2 + $0x18] sm:$0xff]
    %v83 = vld [vmem:[#allocation2 + $0x20] sm:$0xff]
    %v84 = vld [vmem:[#allocation2 + $0x28] sm:$0xff]
    %v85 = vld [vmem:[#allocation2 + $0x30] sm:$0xff]
    %v86 = vld [vmem:[#allocation2 + $0x38] sm:$0xff]
    %v87 = vld [vmem:[#allocation2 + $0x40] sm:$0xff]
    %v88 = vld [vmem:[#allocation2 + $0x48] sm:$0xff]
    %v89 = vld [vmem:[#allocation2 + $0x50] sm:$0xff]
    %v90 = vld [vmem:[#allocation2 + $0x58] sm:$0xff]
    %v91 = vld [vmem:[#allocation2 + $0x60] sm:$0xff]
    %v92 = vld [vmem:[#allocation2 + $0x68] sm:$0xff]
    %v93 = vld [vmem:[#allocation2 + $0x70] sm:$0xff]
    %v94 = vld [vmem:[#allocation2 + $0x78] sm:$0xff]
    %v95 = vld [vmem:[#allocation5] sm:$0xff]
    %v96 = vld [vmem:[#allocation5 + $0x8] sm:$0xff]
    %v97 = vld [vmem:[#allocation5 + $0x10] sm:$0xff]
    %v98 = vld [vmem:[#allocation5 + $0x18] sm:$0xff]
    %v99 = vld [vmem:[#allocation5 + $0x20] sm:$0xff]
    %v100 = vld [vmem:[#allocation5 + $0x28] sm:$0xff]
    %v101 = vld [vmem:[#allocation5 + $0x30] sm:$0xff]
    %v102 = vld [vmem:[#allocation5 + $0x38] sm:$0xff]
    %v103 = vld [vmem:[#allocation5 + $0x40] sm:$0xff]
    %v104 = vld [vmem:[#allocation5 + $0x48] sm:$0xff]
    %v105 = vld [vmem:[#allocation5 + $0x50] sm:$0xff]
    %v106 = vld [vmem:[#allocation5 + $0x58] sm:$0xff]
    %v107 = vld [vmem:[#allocation5 + $0x60] sm:$0xff]
    %v108 = vld [vmem:[#allocation5 + $0x68] sm:$0xff]
    %v109 = vld [vmem:[#allocation5 + $0x70] sm:$0xff]
    %v110 = vld [vmem:[#allocation5 + $0x78] sm:$0xff]
    %v111 = vld [vmem:[#allocation5 + $0x80] sm:$0xff]
    %v112 = vld [vmem:[#allocation5 + $0x88] sm:$0xff]
    %v113 = vld [vmem:[#allocation5 + $0x90] sm:$0xff]
    %v114 = vld [vmem:[#allocation5 + $0x98] sm:$0xff]
    %v115 = vld [vmem:[#allocation5 + $0xa0] sm:$0xff]
    %v116 = vld [vmem:[#allocation5 + $0xa8] sm:$0xff]
    %v117 = vld [vmem:[#allocation5 + $0xb0] sm:$0xff]
    %v118 = vld [vmem:[#allocation5 + $0xb8] sm:$0xff]
    %v119 = vld [vmem:[#allocation5 + $0xc0] sm:$0xff]
    %v120 = vld [vmem:[#allocation5 + $0xc8] sm:$0xff]
    %v121 = vld [vmem:[#allocation5 + $0xd0] sm:$0xff]
    %v122 = vld [vmem:[#allocation5 + $0xd8] sm:$0xff]
    %v123 = vld [vmem:[#allocation5 + $0xe0] sm:$0xff]
    %v124 = vld [vmem:[#allocation5 + $0xe8] sm:$0xff]
    %v125 = vld [vmem:[#allocation5 + $0xf0] sm:$0xff]
    %v126 = vld [vmem:[#allocation5 + $0xf8] sm:$0xff]
    %v127 = vld [vmem:[#allocation7] sm:$0x3]
    %v129 = vperm.slane %v127, 0
    %v130 = vperm.slane %v127, 1
    %133 = vmatpush.msra.mxu0 %v125
    %134 = vmatpush.msra.mxu0 %v123
    %135 = vmatpush.msra.mxu0 %v121
    %136 = vmatpush.msra.mxu0 %v119
    %137 = vmatpush.msra.mxu0 %v117
    %138 = vmatpush.msra.mxu0 %v115
    %139 = vmatpush.msra.mxu0 %v113
    %140 = vmatpush.msra.mxu0 %v111
    %141 = vmatpush.msra.mxu0 %v109
    %142 = vmatpush.msra.mxu0 %v107
    %143 = vmatpush.msra.mxu0 %v105
    %144 = vmatpush.msra.mxu0 %v103
    %145 = vmatpush.msra.mxu0 %v101
    %146 = vmatpush.msra.mxu0 %v99
    %147 = vmatpush.msra.mxu0 %v97
    %148 = vmatpush.msra.mxu0 %v95
    %149 = vmatmul.f32.gmra.mxu0 %v79
    %v150 = vpop.f32.mrf.mxu0
    %v151 = vadd.f32 %v129, %v150
    %152 = vmatmul.f32.gmra.mxu0 %v80
    %v153 = vpop.f32.mrf.mxu0
    %v154 = vadd.f32 %v129, %v153
    %155 = vmatmul.f32.gmra.mxu0 %v81
    %v156 = vpop.f32.mrf.mxu0
    %v157 = vadd.f32 %v129, %v156
    %158 = vmatmul.f32.gmra.mxu0 %v82
    %v159 = vpop.f32.mrf.mxu0
    %v160 = vadd.f32 %v129, %v159
    %161 = vmatmul.f32.gmra.mxu0 %v83
    %v162 = vpop.f32.mrf.mxu0
    %v163 = vadd.f32 %v129, %v162
    %164 = vmatmul.f32.gmra.mxu0 %v84
    %v165 = vpop.f32.mrf.mxu0
    %v166 = vadd.f32 %v129, %v165
    %167 = vmatmul.f32.gmra.mxu0 %v85
    %v168 = vpop.f32.mrf.mxu0
    %v169 = vadd.f32 %v129, %v168
    %170 = vmatmul.f32.gmra.mxu0 %v86
    %v171 = vpop.f32.mrf.mxu0
    %v172 = vadd.f32 %v129, %v171
    %173 = vmatmul.f32.gmra.mxu0 %v87
    %v174 = vpop.f32.mrf.mxu0
    %v175 = vadd.f32 %v129, %v174
    %176 = vmatmul.f32.gmra.mxu0 %v88
    %v177 = vpop.f32.mrf.mxu0
    %v178 = vadd.f32 %v129, %v177
    %179 = vmatmul.f32.gmra.mxu0 %v89
    %v180 = vpop.f32.mrf.mxu0
    %v181 = vadd.f32 %v129, %v180
    %182 = vmatmul.f32.gmra.mxu0 %v90
    %v183 = vpop.f32.mrf.mxu0
    %v184 = vadd.f32 %v129, %v183
    %185 = vmatmul.f32.gmra.mxu0 %v91
    %v186 = vpop.f32.mrf.mxu0
    %v187 = vadd.f32 %v129, %v186
    %188 = vmatmul.f32.gmra.mxu0 %v92
    %v189 = vpop.f32.mrf.mxu0
    %v190 = vadd.f32 %v129, %v189
    %191 = vmatmul.f32.gmra.mxu0 %v93
    %v192 = vpop.f32.mrf.mxu0
    %v193 = vadd.f32 %v129, %v192
    %194 = vmatmul.f32.gmra.mxu0 %v94
    %v195 = vpop.f32.mrf.mxu0
    %v196 = vadd.f32 %v129, %v195
    %197 = vdwg.mxu0
    %198 = vmatpush.msra.mxu0 %v126
    %199 = vmatpush.msra.mxu0 %v124
    %200 = vmatpush.msra.mxu0 %v122
    %201 = vmatpush.msra.mxu0 %v120
    %202 = vmatpush.msra.mxu0 %v118
    %203 = vmatpush.msra.mxu0 %v116
    %204 = vmatpush.msra.mxu0 %v114
    %205 = vmatpush.msra.mxu0 %v112
    %206 = vmatpush.msra.mxu0 %v110
    %207 = vmatpush.msra.mxu0 %v108
    %208 = vmatpush.msra.mxu0 %v106
    %209 = vmatpush.msra.mxu0 %v104
    %210 = vmatpush.msra.mxu0 %v102
    %211 = vmatpush.msra.mxu0 %v100
    %212 = vmatpush.msra.mxu0 %v98
    %213 = vmatpush.msra.mxu0 %v96
    %214 = vmatmul.f32.gmra.mxu0 %v79
    %v215 = vpop.f32.mrf.mxu0
    %v216 = vadd.f32 %v130, %v215
    %217 = vmatmul.f32.gmra.mxu0 %v80
    %v218 = vpop.f32.mrf.mxu0
    %v219 = vadd.f32 %v130, %v218
    %220 = vmatmul.f32.gmra.mxu0 %v81
    %v221 = vpop.f32.mrf.mxu0
    %v222 = vadd.f32 %v130, %v221
    %223 = vmatmul.f32.gmra.mxu0 %v82
    %v224 = vpop.f32.mrf.mxu0
    %v225 = vadd.f32 %v130, %v224
    %226 = vmatmul.f32.gmra.mxu0 %v83
    %v227 = vpop.f32.mrf.mxu0
    %v228 = vadd.f32 %v130, %v227
    %229 = vmatmul.f32.gmra.mxu0 %v84
    %v230 = vpop.f32.mrf.mxu0
    %v231 = vadd.f32 %v130, %v230
    %232 = vmatmul.f32.gmra.mxu0 %v85
    %v233 = vpop.f32.mrf.mxu0
    %v234 = vadd.f32 %v130, %v233
    %235 = vmatmul.f32.gmra.mxu0 %v86
    %v236 = vpop.f32.mrf.mxu0
    %v237 = vadd.f32 %v130, %v236
    %238 = vmatmul.f32.gmra.mxu0 %v87
    %v239 = vpop.f32.mrf.mxu0
    %v240 = vadd.f32 %v130, %v239
    %241 = vmatmul.f32.gmra.mxu0 %v88
    %v242 = vpop.f32.mrf.mxu0
    %v243 = vadd.f32 %v130, %v242
    %244 = vmatmul.f32.gmra.mxu0 %v89
    %v245 = vpop.f32.mrf.mxu0
    %v246 = vadd.f32 %v130, %v245
    %247 = vmatmul.f32.gmra.mxu0 %v90
    %v248 = vpop.f32.mrf.mxu0
    %v249 = vadd.f32 %v130, %v248
    %250 = vmatmul.f32.gmra.mxu0 %v91
    %v251 = vpop.f32.mrf.mxu0
    %v252 = vadd.f32 %v130, %v251
    %253 = vmatmul.f32.gmra.mxu0 %v92
    %v254 = vpop.f32.mrf.mxu0
    %v255 = vadd.f32 %v130, %v254
    %256 = vmatmul.f32.gmra.mxu0 %v93
    %v257 = vpop.f32.mrf.mxu0
    %v258 = vadd.f32 %v130, %v257
    %259 = vmatmul.f32.gmra.mxu0 %v94
    %v260 = vpop.f32.mrf.mxu0
    %v261 = vadd.f32 %v130, %v260
    %262 = vdwg.mxu0
    %v263 = vmax.f32 %v151, 0.0
    %v264 = vmax.f32 %v154, 0.0
    %v265 = vmax.f32 %v157, 0.0
    %v266 = vmax.f32 %v160, 0.0
    %v267 = vmax.f32 %v163, 0.0
    %v268 = vmax.f32 %v166, 0.0
    %v269 = vmax.f32 %v169, 0.0
    %v270 = vmax.f32 %v172, 0.0
    %v271 = vmax.f32 %v175, 0.0
    %v272 = vmax.f32 %v178, 0.0
    %v273 = vmax.f32 %v181, 0.0
    %v274 = vmax.f32 %v184, 0.0
    %v275 = vmax.f32 %v187, 0.0
    %v276 = vmax.f32 %v190, 0.0
    %v277 = vmax.f32 %v193, 0.0
    %v278 = vmax.f32 %v196, 0.0
    %v279 = vld [vmem:[#allocation8] sm:$0xff]
    %v280 = vld [vmem:[#allocation8 + $0x8] sm:$0xff]
    %v281 = vld [vmem:[#allocation8 + $0x10] sm:$0xff]
    %v282 = vld [vmem:[#allocation8 + $0x18] sm:$0xff]
    %v283 = vld [vmem:[#allocation8 + $0x20] sm:$0xff]
    %v284 = vld [vmem:[#allocation8 + $0x28] sm:$0xff]
    %v285 = vld [vmem:[#allocation8 + $0x30] sm:$0xff]
    %v286 = vld [vmem:[#allocation8 + $0x38] sm:$0xff]
    %v287 = vld [vmem:[#allocation8 + $0x40] sm:$0xff]
    %v288 = vld [vmem:[#allocation8 + $0x48] sm:$0xff]
    %v289 = vld [vmem:[#allocation8 + $0x50] sm:$0xff]
    %v290 = vld [vmem:[#allocation8 + $0x58] sm:$0xff]
    %v291 = vld [vmem:[#allocation8 + $0x60] sm:$0xff]
    %v292 = vld [vmem:[#allocation8 + $0x68] sm:$0xff]
    %v293 = vld [vmem:[#allocation8 + $0x70] sm:$0xff]
    %v294 = vld [vmem:[#allocation8 + $0x78] sm:$0xff]
    %295 = vmatpush.msra.mxu0 %v294
    %296 = vmatpush.msra.mxu0 %v293
    %297 = vmatpush.msra.mxu0 %v292
    %298 = vmatpush.msra.mxu0 %v291
    %299 = vmatpush.msra.mxu0 %v290
    %300 = vmatpush.msra.mxu0 %v289
    %301 = vmatpush.msra.mxu0 %v288
    %302 = vmatpush.msra.mxu0 %v287
    %303 = vmatpush.msra.mxu0 %v286
    %304 = vmatpush.msra.mxu0 %v285
    %305 = vmatpush.msra.mxu0 %v284
    %306 = vmatpush.msra.mxu0 %v283
    %307 = vmatpush.msra.mxu0 %v282
    %308 = vmatpush.msra.mxu0 %v281
    %309 = vmatpush.msra.mxu0 %v280
    %310 = vmatpush.msra.mxu0 %v279
    %311 = vmatmul.f32.gmra.mxu0 %v263
    %v312 = vpop.f32.mrf.mxu0
    %v313 = vadd.f32 %v216, %v312
    %314 = vmatmul.f32.gmra.mxu0 %v264
    %v315 = vpop.f32.mrf.mxu0
    %v316 = vadd.f32 %v219, %v315
    %317 = vmatmul.f32.gmra.mxu0 %v265
    %v318 = vpop.f32.mrf.mxu0
    %v319 = vadd.f32 %v222, %v318
    %320 = vmatmul.f32.gmra.mxu0 %v266
    %v321 = vpop.f32.mrf.mxu0
    %v322 = vadd.f32 %v225, %v321
    %323 = vmatmul.f32.gmra.mxu0 %v267
    %v324 = vpop.f32.mrf.mxu0
    %v325 = vadd.f32 %v228, %v324
    %326 = vmatmul.f32.gmra.mxu0 %v268
    %v327 = vpop.f32.mrf.mxu0
    %v328 = vadd.f32 %v231, %v327
    %329 = vmatmul.f32.gmra.mxu0 %v269
    %v330 = vpop.f32.mrf.mxu0
    %v331 = vadd.f32 %v234, %v330
    %332 = vmatmul.f32.gmra.mxu0 %v270
    %v333 = vpop.f32.mrf.mxu0
    %v334 = vadd.f32 %v237, %v333
    %335 = vmatmul.f32.gmra.mxu0 %v271
    %v336 = vpop.f32.mrf.mxu0
    %v337 = vadd.f32 %v240, %v336
    %338 = vmatmul.f32.gmra.mxu0 %v272
    %v339 = vpop.f32.mrf.mxu0
    %v340 = vadd.f32 %v243, %v339
    %341 = vmatmul.f32.gmra.mxu0 %v273
    %v342 = vpop.f32.mrf.mxu0
    %v343 = vadd.f32 %v246, %v342
    %344 = vmatmul.f32.gmra.mxu0 %v274
    %v345 = vpop.f32.mrf.mxu0
    %v346 = vadd.f32 %v249, %v345
    %347 = vmatmul.f32.gmra.mxu0 %v275
    %v348 = vpop.f32.mrf.mxu0
    %v349 = vadd.f32 %v252, %v348
    %350 = vmatmul.f32.gmra.mxu0 %v276
    %v351 = vpop.f32.mrf.mxu0
    %v352 = vadd.f32 %v255, %v351
    %353 = vmatmul.f32.gmra.mxu0 %v277
    %v354 = vpop.f32.mrf.mxu0
    %v355 = vadd.f32 %v258, %v354
    %356 = vmatmul.f32.gmra.mxu0 %v278
    %v357 = vpop.f32.mrf.mxu0
    %v358 = vadd.f32 %v261, %v357
    %359 = vdwg.mxu0
    %360 = vst [vmem:[#allocation10] sm:$0xff] %v313
    %361 = vst [vmem:[#allocation10 + $0x8] sm:$0xff] %v316
    %362 = vst [vmem:[#allocation10 + $0x10] sm:$0xff] %v319
    %363 = vst [vmem:[#allocation10 + $0x18] sm:$0xff] %v322
    %364 = vst [vmem:[#allocation10 + $0x20] sm:$0xff] %v325
    %365 = vst [vmem:[#allocation10 + $0x28] sm:$0xff] %v328
    %366 = vst [vmem:[#allocation10 + $0x30] sm:$0xff] %v331
    %367 = vst [vmem:[#allocation10 + $0x38] sm:$0xff] %v334
    %368 = vst [vmem:[#allocation10 + $0x40] sm:$0xff] %v337
    %369 = vst [vmem:[#allocation10 + $0x48] sm:$0xff] %v340
    %370 = vst [vmem:[#allocation10 + $0x50] sm:$0xff] %v343
    %371 = vst [vmem:[#allocation10 + $0x58] sm:$0xff] %v346
    %372 = vst [vmem:[#allocation10 + $0x60] sm:$0xff] %v349
    %373 = vst [vmem:[#allocation10 + $0x68] sm:$0xff] %v352
    %374 = vst [vmem:[#allocation10 + $0x70] sm:$0xff] %v355
    %375 = vst [vmem:[#allocation10 + $0x78] sm:$0xff] %v358
    // Predicated region
    $region34: #{tpu_custom_call.1} parent=1 // pred_check
      _
    $region35: #{tpu_custom_call.1} parent=1 // pred_check_branch
      %377 = sbr.rel (0) target = $region37
    $region36: #{tpu_custom_call.1} parent=1 // pred_region
      %379 = vsyncadd [#allocation4], 0
      %s380 = sshll.u32 [#allocation10], 4
      %s381 = int_to_ptr.vmem [resolvable:$true] %s380
      %s382 = sshll.u32 %s4, 4
      %s383 = int_to_ptr.hbm [resolvable:$true] %s382
      %388 = dma.vmem_to_hbm [thread:$0]  %s381, 2048, %s383, [#allocation4], 128, 128, 8
    $region37: #{tpu_custom_call.1} parent=1 // pred_fallthru
      _
    // Predicated region
    $region38: #{tpu_custom_call.1} parent=1 // pred_check
      _
    $region39: #{tpu_custom_call.1} parent=1 // pred_check_branch
      %390 = sbr.rel (0) target = $region41
    $region40: #{tpu_custom_call.1} parent=1 // pred_region
      %392 = dma.done [#allocation4], 2048
    $region41: #{tpu_custom_call.1} parent=1 // pred_fallthru
      _
    %393 = vsyncpa [#allocation3], 1
    %394 = vsyncpa [#allocation6], 1
    %395 = vsyncpa [#allocation9], 1
    %396 = vsyncpa [#allocation4], 1

</llo_original>
